<compile_context>
chip_gen: v7x
topology: tpu7x:2x2x1
jax: 0.10.0
libtpu: 0.0.40
codegen_flags: <defaults>
</compile_context>

<pallas_src>
import functools

import jax
import jax.numpy as jnp
from jax.experimental import pallas as pl
from jax.experimental.pallas import tpu as pltpu


def _round_up(x, m):
    return ((x + m - 1) // m) * m


def _vmem_budget():
    """Returns (x_tile_bytes, vmem_limit_bytes), per TPU generation."""
    try:
        phys = pltpu.get_tpu_info().vmem_capacity_bytes
    except Exception:
        phys = 64 * 1024 * 1024                      # be v7x-conservative
    if phys >= 128 * 1024 * 1024:                    # v5e / v6e (128 MiB VMEM)
        return 12 * 1024 * 1024, 64 * 1024 * 1024
    return 8 * 1024 * 1024, 48 * 1024 * 1024         # v7x (64 MiB physical VMEM)


def _logreg_kernel(x_ref, w_hi_ref, w_lo_ref, b_ref, o_ref, *,
                   f_tile, f_valid, mask_tail):
    f = pl.program_id(1)

    @pl.when(f == 0)
    def _init():
        o_ref[...] = jnp.zeros_like(o_ref)

    x = x_ref[...]                                            # (tb, tf) f32
    if mask_tail:
        # Last feature tile may read stale lanes past the real feature width;
        # zero them so they cannot contribute (w is zero-padded there too).
        lane = jax.lax.broadcasted_iota(jnp.int32, x.shape, 1)
        x = jnp.where(lane + f * f_tile < f_valid, x, 0.0)

    # Manual bf16 hi/lo split -> three native bf16 MXU passes with f32
    # accumulation gives ~f32 accuracy without precision flags.
    x_hi = x.astype(jnp.bfloat16)
    x_lo = (x - x_hi.astype(jnp.float32)).astype(jnp.bfloat16)
    dims = (((1,), (1,)), ((), ()))                           # W @ x^T (q@k.T style)
    z = jax.lax.dot_general(w_hi_ref[...], x_hi, dims,
                            preferred_element_type=jnp.float32)
    z += jax.lax.dot_general(w_lo_ref[...], x_hi, dims,
                             preferred_element_type=jnp.float32)
    z += jax.lax.dot_general(w_hi_ref[...], x_lo, dims,
                             preferred_element_type=jnp.float32)
    o_ref[...] += z                                           # (k, tb) lane-dense

    @pl.when(f == pl.num_programs(1) - 1)
    def _finalize():
        o_ref[...] = jax.nn.sigmoid(o_ref[...] + b_ref[0, 0])


def logistic_regression(x, w, b, *, x_tile_bytes=None, max_f_tile=None):
    """x: (B, F) f32, w: (1, F) f32 (nn.Linear layout), b: (1, 1) f32
    -> (B, 1) f32 = sigmoid(x @ w.T + b)."""
    B, F = x.shape
    assert w.shape == (1, F) and b.shape == (1, 1)
    x = x.astype(jnp.float32)
    w = w.astype(jnp.float32)
    b = b.astype(jnp.float32)

    # ---- feature lane-packing (free contiguous reshape) ---------------------
    k = 128 // F if (F < 128 and 128 % F == 0 and B % (128 // F) == 0) else 1
    Bp, Fp = B // k, k * F
    xp = x.reshape(Bp, Fp)
    # Block-diagonal packed weight: row j carries w in lanes [j*F, (j+1)*F).
    wp = jnp.kron(jnp.eye(k, dtype=jnp.float32), w)           # (k, Fp)

    # ---- generation-aware tile sizing ---------------------------------------
    default_budget, vmem_limit = _vmem_budget()
    if x_tile_bytes is None:
        x_tile_bytes = default_budget

    f_pad = _round_up(Fp, 128)                                # real (lane-padded) width
    max_f_lanes = max(128, (x_tile_bytes // (4 * 128)) // 128 * 128)
    if max_f_tile is not None:
        max_f_lanes = min(max_f_lanes, max(128, _round_up(max_f_tile, 128)))
    if f_pad <= max_f_lanes:
        tf, n_f = Fp, 1                                       # features un-tiled
    else:
        tf = max_f_lanes                                      # reduction grid axis
        n_f = pl.cdiv(Fp, tf)
    tf_pad = _round_up(tf, 128)

    # Largest 128-row multiple whose (lane-padded) x block fits the budget.
    tb = max(128, (x_tile_bytes // (4 * tf_pad)) // 128 * 128)
    tb = min(tb, _round_up(Bp, 128))
    if _round_up(Bp, 128) >= 256:
        # Keep >= 2 grid steps so the "parallel" batch axis can land on both
        # TensorCores on v7x (harmless on v5e/v6e).
        tb = min(tb, _round_up(pl.cdiv(Bp, 2), 128))
    n_b = pl.cdiv(Bp, tb)

    # Zero-pad the tiny weight along features if the feature grid over-covers.
    f_total = n_f * tf
    if f_total != Fp:
        wp = jnp.pad(wp, ((0, 0), (0, f_total - Fp)))
    w_hi = wp.astype(jnp.bfloat16)
    w_lo = (wp - w_hi.astype(jnp.float32)).astype(jnp.bfloat16)

    kernel = functools.partial(_logreg_kernel, f_tile=tf, f_valid=Fp,
                               mask_tail=(f_total != Fp))

    out = pl.pallas_call(
        kernel,
        out_shape=jax.ShapeDtypeStruct((k, n_b * tb), jnp.float32),
        grid=(n_b, n_f),
        in_specs=[
            pl.BlockSpec((tb, tf), lambda i, f: (i, f)),            # x: streamed
            pl.BlockSpec((k, tf), lambda i, f: (0, f)),             # w_hi: resident
            pl.BlockSpec((k, tf), lambda i, f: (0, f)),             # w_lo: resident
            pl.BlockSpec(memory_space=pltpu.MemorySpace.SMEM),      # bias scalar
        ],
        out_specs=pl.BlockSpec((k, tb), lambda i, f: (0, i)),       # lane-dense
        compiler_params=pltpu.CompilerParams(
            dimension_semantics=("parallel", "arbitrary"),
            vmem_limit_bytes=vmem_limit,
        ),
    )(xp, w_hi, w_lo, b)

    # Tiny un-permute of the lane-dense result: out[j, p] = sample k*p + j.
    return out.T.reshape(-1)[:B].reshape(B, 1)


if __name__ == "__main__":
    key = jax.random.PRNGKey(0)
    k1, k2, k3, k4 = jax.random.split(key, 4)

    def make_params(key, f):
        kw_, kb_ = jax.random.split(key)
        bound = 1.0 / jnp.sqrt(jnp.float32(f))     # nn.Linear-style init
        w = jax.random.uniform(kw_, (1, f), jnp.float32, -bound, bound)
        b = jax.random.uniform(kb_, (1, 1), jnp.float32, -bound, bound)
        return w, b

    def check(key, batch, f, **kwargs):
        kx_, kp_ = jax.random.split(key)
        w, b = make_params(kp_, f)
        x = jax.random.normal(kx_, (batch, f), jnp.float32)
        y = logistic_regression(x, w, b, **kwargs)
        jax.block_until_ready(y)
        # Exact f32 reference (elementwise multiply + sum, no MXU rounding).
        y_ref = jax.nn.sigmoid(jnp.sum(x * w, axis=-1, keepdims=True) + b)
        assert y.shape == (batch, 1)
        err = float(jnp.max(jnp.abs(y - y_ref)))
        assert jnp.allclose(y, y_ref, atol=5e-5, rtol=1e-4), err

    # 1) Tutorial-sized case: F=32 packs 4 samples per 128-lane row, single tile.
    check(k1, 8, 32)
    # 2) Multi batch-tile grid + ragged batch tail (300 packed rows, 128-row tiles).
    check(k2, 1200, 32, x_tile_bytes=64 * 1024)
    # 3) Feature-axis accumulation path with tail-lane masking (F=200, tf=128).
    check(k3, 64, 200, max_f_tile=128)
    # 4) No packing (96 does not divide 128), lane-padded features, odd batch.
    check(k4, 50, 96)

    print("KERNEL_OK")
</pallas_src>

<mosaic_0001>
module attributes {stable_mosaic.version = 11 : i64} {
  func.func @_logreg_kernel(%arg0: i32, %arg1: i32, %arg2: memref<128x128xf32, #tpu.memory_space<vmem>>, %arg3: memref<4x128xbf16, #tpu.memory_space<vmem>>, %arg4: memref<4x128xbf16, #tpu.memory_space<vmem>>, %arg5: memref<1x1xf32, #tpu.memory_space<smem>>, %arg6: memref<4x128xf32, #tpu.memory_space<vmem>>) attributes {dimension_semantics = [#tpu.dimension_semantics<parallel>, #tpu.dimension_semantics<arbitrary>], iteration_bounds = array<i64: 1, 1>, scalar_prefetch = 0 : i64, scratch_operands = 0 : i64, tpu.core_type = #tpu.core_type<tc>, window_params = [{transform_indices = @transform_0, window_bounds = array<i64: 128, 128>}, {transform_indices = @transform_1, window_bounds = array<i64: 4, 128>}, {transform_indices = @transform_2, window_bounds = array<i64: 4, 128>}, {transform_indices = @transform_3, window_bounds = array<i64: 1, 1>}, {transform_indices = @transform_4, window_bounds = array<i64: 4, 128>}]} {
    %c0_i32 = arith.constant 0 : i32
    %0 = arith.cmpi eq, %arg1, %c0_i32 : i32
    %1 = arith.extui %0 : i1 to i32
    %c0_i32_0 = arith.constant 0 : i32
    %2 = arith.cmpi ne, %1, %c0_i32_0 : i32
    scf.if %2 {
      %cst_16 = arith.constant 0.000000e+00 : f32
      %22 = vector.broadcast %cst_16 : f32 to vector<4x128xf32>
      %c0_17 = arith.constant 0 : index
      %c0_18 = arith.constant 0 : index
      %23 = vector.load %arg6[%c0_17, %c0_18] : memref<4x128xf32, #tpu.memory_space<vmem>>, vector<4x128xf32>
      tpu.vector_store %arg6[%c0_17, %c0_18], %22 {strides = array<i32>} : memref<4x128xf32, #tpu.memory_space<vmem>>, vector<4x128xf32>,
    } else {
    }
    %c0 = arith.constant 0 : index
    %c0_1 = arith.constant 0 : index
    %3 = vector.load %arg2[%c0, %c0_1] : memref<128x128xf32, #tpu.memory_space<vmem>>, vector<128x128xf32>
    %4 = arith.truncf %3 : vector<128x128xf32> to vector<128x128xbf16>
    %5 = arith.extf %4 : vector<128x128xbf16> to vector<128x128xf32>
    %6 = arith.subf %3, %5 : vector<128x128xf32>
    %7 = arith.truncf %6 : vector<128x128xf32> to vector<128x128xbf16>
    %c0_2 = arith.constant 0 : index
    %c0_3 = arith.constant 0 : index
    %8 = vector.load %arg3[%c0_2, %c0_3] : memref<4x128xbf16, #tpu.memory_space<vmem>>, vector<4x128xbf16>
    %cst = arith.constant dense<0.000000e+00> : vector<4x128xf32>
    %9 = tpu.matmul %8, %4, %cst {dimension_numbers = #tpu.dot_dimension_numbers<[1], [1], [0], [0], [0, 0, 1, 0], [], []>} : vector<4x128xbf16>, vector<128x128xbf16>, vector<4x128xf32> -> vector<4x128xf32>
    %c0_4 = arith.constant 0 : index
    %c0_5 = arith.constant 0 : index
    %10 = vector.load %arg4[%c0_4, %c0_5] : memref<4x128xbf16, #tpu.memory_space<vmem>>, vector<4x128xbf16>
    %cst_6 = arith.constant dense<0.000000e+00> : vector<4x128xf32>
    %11 = tpu.matmul %10, %4, %cst_6 {dimension_numbers = #tpu.dot_dimension_numbers<[1], [1], [0], [0], [0, 0, 1, 0], [], []>} : vector<4x128xbf16>, vector<128x128xbf16>, vector<4x128xf32> -> vector<4x128xf32>
    %12 = arith.addf %9, %11 : vector<4x128xf32>
    %c0_7 = arith.constant 0 : index
    %c0_8 = arith.constant 0 : index
    %13 = vector.load %arg3[%c0_7, %c0_8] : memref<4x128xbf16, #tpu.memory_space<vmem>>, vector<4x128xbf16>
    %cst_9 = arith.constant dense<0.000000e+00> : vector<4x128xf32>
    %14 = tpu.matmul %13, %7, %cst_9 {dimension_numbers = #tpu.dot_dimension_numbers<[1], [1], [0], [0], [0, 0, 1, 0], [], []>} : vector<4x128xbf16>, vector<128x128xbf16>, vector<4x128xf32> -> vector<4x128xf32>
    %15 = arith.addf %12, %14 : vector<4x128xf32>
    %c0_10 = arith.constant 0 : index
    %c0_11 = arith.constant 0 : index
    %16 = vector.load %arg6[%c0_10, %c0_11] : memref<4x128xf32, #tpu.memory_space<vmem>>, vector<4x128xf32>
    %17 = arith.addf %16, %15 : vector<4x128xf32>
    %c0_12 = arith.constant 0 : index
    %c0_13 = arith.constant 0 : index
    %18 = vector.load %arg6[%c0_12, %c0_13] : memref<4x128xf32, #tpu.memory_space<vmem>>, vector<4x128xf32>
    tpu.vector_store %arg6[%c0_12, %c0_13], %17 {strides = array<i32>} : memref<4x128xf32, #tpu.memory_space<vmem>>, vector<4x128xf32>,
    %c0_i32_14 = arith.constant 0 : i32
    %19 = arith.cmpi eq, %arg1, %c0_i32_14 : i32
    %20 = arith.extui %19 : i1 to i32
    %c0_i32_15 = arith.constant 0 : i32
    %21 = arith.cmpi ne, %20, %c0_i32_15 : i32
    scf.if %21 {
      %c0_16 = arith.constant 0 : index
      %c0_17 = arith.constant 0 : index
      %22 = vector.load %arg6[%c0_16, %c0_17] : memref<4x128xf32, #tpu.memory_space<vmem>>, vector<4x128xf32>
      %c0_18 = arith.constant 0 : index
      %c0_19 = arith.constant 0 : index
      %23 = memref.load %arg5[%c0_18, %c0_19] : memref<1x1xf32, #tpu.memory_space<smem>>
      %24 = vector.broadcast %23 : f32 to vector<4x128xf32>
      %25 = arith.addf %22, %24 : vector<4x128xf32>
      %26 = arith.negf %25 : vector<4x128xf32>
      %27 = math.exp %26 : vector<4x128xf32>
      %cst_20 = arith.constant 1.000000e+00 : f32
      %28 = vector.broadcast %cst_20 : f32 to vector<4x128xf32>
      %29 = arith.addf %28, %27 : vector<4x128xf32>
      %30 = arith.divf %28, %29 : vector<4x128xf32>
      %c0_21 = arith.constant 0 : index
      %c0_22 = arith.constant 0 : index
      %31 = vector.load %arg6[%c0_21, %c0_22] : memref<4x128xf32, #tpu.memory_space<vmem>>, vector<4x128xf32>
      tpu.vector_store %arg6[%c0_21, %c0_22], %30 {strides = array<i32>} : memref<4x128xf32, #tpu.memory_space<vmem>>, vector<4x128xf32>,
    } else {
    }
    return
  }
  func.func @transform_0(%arg0: i32, %arg1: i32) -> (i32, i32) {
    %c0_i32 = arith.constant 0 : i32
    return %arg0, %arg1 : i32, i32
  }
  func.func @transform_1(%arg0: i32, %arg1: i32) -> (i32, i32) {
    %c0_i32 = arith.constant 0 : i32
    %c0_i32_0 = arith.constant 0 : i32
    return %c0_i32, %arg1 : i32, i32
  }
  func.func @transform_2(%arg0: i32, %arg1: i32) -> (i32, i32) {
    %c0_i32 = arith.constant 0 : i32
    %c0_i32_0 = arith.constant 0 : i32
    return %c0_i32, %arg1 : i32, i32
  }
  func.func @transform_3(%arg0: i32, %arg1: i32) -> (i32, i32) {
    %c0_i32 = arith.constant 0 : i32
    %c0_i32_0 = arith.constant 0 : i32
    %c0_i32_1 = arith.constant 0 : i32
    return %c0_i32, %c0_i32_0 : i32, i32
  }
  func.func @transform_4(%arg0: i32, %arg1: i32) -> (i32, i32) {
    %c0_i32 = arith.constant 0 : i32
    %c0_i32_0 = arith.constant 0 : i32
    return %c0_i32, %arg0 : i32, i32
  }
}

</mosaic_0001>

<llo_original>
// kernel: tpu_custom_call.1
$region0: #{tpu_custom_call.1}
  #allocation0 [shape = 'u32[]', space=smem, size = 0x4, offset = 0x4, fixed_abs, tag = 'smem constant byte address 0x4 - core index']
  #allocation1 [shape = 'u32[144,128]{1,0:T(1,128)}', space=vmem, size = 0x12000, scoped, tag = 'internal scratch']
  #allocation2 [shape = 'f32[1,1]{1,0:T(1,128)S(6)}', space=smem, size = 0x200, scoped, tag = 'scoped memory for tpu_custom_call.1']
  %s0 = inlined_call_operand.vmem [shape: f32[2,128], index: 0, kind: input, shape index: {}]
  %s1 = inlined_call_operand.vmem [shape: bf16[4,128], index: 1, kind: input, shape index: {}]
  %s2 = inlined_call_operand.vmem [shape: bf16[4,128], index: 2, kind: input, shape index: {}]
  %s3 = inlined_call_operand.<no memory space> [shape: f32[1,1], index: 3, kind: input, shape index: {}]
  %s4 = inlined_call_operand.hbm [shape: f32[4,128], index: 4, kind: output, shape index: {}]
  %s5 = sld [smem:[#allocation0]]
  $region34: #{tpu_custom_call.1} parent=0
    _
  %s7 = ssub.s32 1, %s5
  %s8 = scalar_select 0, %s7, %s5
  %9 = sst [smem:[#allocation2]] %s3
  $region1: #{tpu_custom_call.1} parent=0
    #allocation3 [shape = 'u8[2048]{0}', space=vmem, size = 0x800, scoped, tag = 'output window, operand 0, single buffered']
    #allocation4 [shape = 's32[1]{0}', space=sflag, size = 0x4, scoped, tag = 'scoped memory for tpu_custom_call.1']
    %10 = vsyncpa [#allocation4], 0
    // Predicated region
    $region2: #{tpu_custom_call.1} parent=1 // pred_check
      _
    $region3: #{tpu_custom_call.1} parent=1 // pred_check_branch
      %12 = sbr.rel (0) target = $region5
    $region4: #{tpu_custom_call.1} parent=1 // pred_region
      _
    $region5: #{tpu_custom_call.1} parent=1 // pred_fallthru
      _
    // Predicated region
    $region6: #{tpu_custom_call.1} parent=1 // pred_check
      _
    $region7: #{tpu_custom_call.1} parent=1 // pred_check_branch
      %14 = sbr.rel (0) target = $region9
    $region8: #{tpu_custom_call.1} parent=1 // pred_region
      _
    $region9: #{tpu_custom_call.1} parent=1 // pred_fallthru
      _
    // Predicated region
    $region10: #{tpu_custom_call.1} parent=1 // pred_check
      _
    $region11: #{tpu_custom_call.1} parent=1 // pred_check_branch
      %16 = sbr.rel (0) target = $region13
    $region12: #{tpu_custom_call.1} parent=1 // pred_region
      _
    $region13: #{tpu_custom_call.1} parent=1 // pred_fallthru
      _
    // Predicated region
    $region14: #{tpu_custom_call.1} parent=1 // pred_check
      _
    $region15: #{tpu_custom_call.1} parent=1 // pred_check_branch
      %18 = sbr.rel (0) target = $region17
    $region16: #{tpu_custom_call.1} parent=1 // pred_region
      _
    $region17: #{tpu_custom_call.1} parent=1 // pred_fallthru
      _
    %p20 = scmp.eq.s32.totalorder 0, 0
    // Predicated region
    $region18: #{tpu_custom_call.1} parent=1 // pred_check
      %p21 = pneg %p20
    $region19: #{tpu_custom_call.1} parent=1 // pred_check_branch
      %23 = sbr.rel (%p21) target = $region21
    $region20: #{tpu_custom_call.1} parent=1 // pred_region
      %24 = vst [vmem:[#allocation3] sm:$0xf] 0.0
    $region21: #{tpu_custom_call.1} parent=1 // pred_fallthru
      _
    %v25 = vld [vmem:[%s0] sm:$0xff]
    %v26 = vld [vmem:[%s0 + $0x8] sm:$0xff]
    %v27 = vld [vmem:[%s0 + $0x10] sm:$0xff]
    %v28 = vld [vmem:[%s0 + $0x18] sm:$0xff]
    %v29 = vld [vmem:[%s0 + $0x20] sm:$0xff]
    %v30 = vld [vmem:[%s0 + $0x28] sm:$0xff]
    %v31 = vld [vmem:[%s0 + $0x30] sm:$0xff]
    %v32 = vld [vmem:[%s0 + $0x38] sm:$0xff]
    %v33 = vld [vmem:[%s0 + $0x40] sm:$0xff]
    %v34 = vld [vmem:[%s0 + $0x48] sm:$0xff]
    %v35 = vld [vmem:[%s0 + $0x50] sm:$0xff]
    %v36 = vld [vmem:[%s0 + $0x58] sm:$0xff]
    %v37 = vld [vmem:[%s0 + $0x60] sm:$0xff]
    %v38 = vld [vmem:[%s0 + $0x68] sm:$0xff]
    %v39 = vld [vmem:[%s0 + $0x70] sm:$0xff]
    %v40 = vld [vmem:[%s0 + $0x78] sm:$0xff]
    %v41 = vpack.c.bf16 %v26, %v25
    %v42 = vpack.c.bf16 %v28, %v27
    %v43 = vpack.c.bf16 %v30, %v29
    %v44 = vpack.c.bf16 %v32, %v31
    %v45 = vpack.c.bf16 %v34, %v33
    %v46 = vpack.c.bf16 %v36, %v35
    %v47 = vpack.c.bf16 %v38, %v37
    %v48 = vpack.c.bf16 %v40, %v39
    %v49 = vunpack.c.l.bf16 %v41
    %v50 = vunpack.c.h.bf16 %v41
    %v51 = vunpack.c.l.bf16 %v42
    %v52 = vunpack.c.h.bf16 %v42
    %v53 = vunpack.c.l.bf16 %v43
    %v54 = vunpack.c.h.bf16 %v43
    %v55 = vunpack.c.l.bf16 %v44
    %v56 = vunpack.c.h.bf16 %v44
    %v57 = vunpack.c.l.bf16 %v45
    %v58 = vunpack.c.h.bf16 %v45
    %v59 = vunpack.c.l.bf16 %v46
    %v60 = vunpack.c.h.bf16 %v46
    %v61 = vunpack.c.l.bf16 %v47
    %v62 = vunpack.c.h.bf16 %v47
    %v63 = vunpack.c.l.bf16 %v48
    %v64 = vunpack.c.h.bf16 %v48
    %v65 = vsub.f32 %v25, %v49
    %v66 = vsub.f32 %v26, %v50
    %v67 = vsub.f32 %v27, %v51
    %v68 = vsub.f32 %v28, %v52
    %v69 = vsub.f32 %v29, %v53
    %v70 = vsub.f32 %v30, %v54
    %v71 = vsub.f32 %v31, %v55
    %v72 = vsub.f32 %v32, %v56
    %v73 = vsub.f32 %v33, %v57
    %v74 = vsub.f32 %v34, %v58
    %v75 = vsub.f32 %v35, %v59
    %v76 = vsub.f32 %v36, %v60
    %v77 = vsub.f32 %v37, %v61
    %v78 = vsub.f32 %v38, %v62
    %v79 = vsub.f32 %v39, %v63
    %v80 = vsub.f32 %v40, %v64
    %v81 = vpack.c.bf16 %v66, %v65
    %v82 = vpack.c.bf16 %v68, %v67
    %v83 = vpack.c.bf16 %v70, %v69
    %v84 = vpack.c.bf16 %v72, %v71
    %v85 = vpack.c.bf16 %v74, %v73
    %v86 = vpack.c.bf16 %v76, %v75
    %v87 = vpack.c.bf16 %v78, %v77
    %v88 = vpack.c.bf16 %v80, %v79
    %v89 = vld [vmem:[%s1] sm:$0x3]
    %v90 = vld [vmem:[%s2] sm:$0x3]
    %91 = vmatprep.subr.bf16.mxu0 0
    %92 = vmatpush1.bf16.xpose.msra.mxu0 %v41
    %93 = vmatprep.subr.bf16.mxu0 0
    %94 = vmatpush1.bf16.xpose.msra.mxu0 %v42
    %95 = vmatprep.subr.bf16.mxu0 0
    %96 = vmatpush1.bf16.xpose.msra.mxu0 %v43
    %97 = vmatprep.subr.bf16.mxu0 0
    %98 = vmatpush1.bf16.xpose.msra.mxu0 %v44
    %99 = vmatprep.subr.bf16.mxu0 0
    %100 = vmatpush1.bf16.xpose.msra.mxu0 %v45
    %101 = vmatprep.subr.bf16.mxu0 0
    %102 = vmatpush1.bf16.xpose.msra.mxu0 %v46
    %103 = vmatprep.subr.bf16.mxu0 0
    %104 = vmatpush1.bf16.xpose.msra.mxu0 %v47
    %105 = vmatprep.subr.bf16.mxu0 0
    %106 = vmatpush1.bf16.xpose.msra.mxu0 %v48
    %107 = vmatprep.subr.bf16.mxu0 0
    %108 = vmatpush1.bf16.xpose.msra.mxu0 0
    %109 = vmatprep.subr.bf16.mxu0 0
    %110 = vmatpush1.bf16.xpose.msra.mxu0 0
    %111 = vmatprep.subr.bf16.mxu0 0
    %112 = vmatpush1.bf16.xpose.msra.mxu0 0
    %113 = vmatprep.subr.bf16.mxu0 0
    %114 = vmatpush1.bf16.xpose.msra.mxu0 0
    %115 = vmatprep.subr.bf16.mxu0 0
    %116 = vmatpush1.bf16.xpose.msra.mxu0 0
    %117 = vmatprep.subr.bf16.mxu0 0
    %118 = vmatpush1.bf16.xpose.msra.mxu0 0
    %119 = vmatprep.subr.bf16.mxu0 0
    %120 = vmatpush1.bf16.xpose.msra.mxu0 0
    %121 = vmatprep.subr.bf16.mxu0 0
    %122 = vmatpush1.bf16.xpose.msra.mxu0 0
    %123 = vmatprep.mubr.bf16.mxu0 0
    %124 = vmatmul.mubr.bf16.gmra.mrb[0].mxu0 %v90
    %v125 = vpop.f32.mrb[0].mxu0
    %v126 = vadd.f32 0.0, %v125
    %v127 = vpop.f32.mrb[0].mxu0
    %v128 = vpop.f32.mrb[0].mxu0
    %v129 = vpop.f32.mrb[0].mxu0
    %130 = vdwg.mxu0
    %131 = vmatprep.subr.bf16.mxu0 0
    %132 = vmatpush1.bf16.xpose.msra.mxu0 %v41
    %133 = vmatprep.subr.bf16.mxu0 0
    %134 = vmatpush1.bf16.xpose.msra.mxu0 %v42
    %135 = vmatprep.subr.bf16.mxu0 0
    %136 = vmatpush1.bf16.xpose.msra.mxu0 %v43
    %137 = vmatprep.subr.bf16.mxu0 0
    %138 = vmatpush1.bf16.xpose.msra.mxu0 %v44
    %139 = vmatprep.subr.bf16.mxu0 0
    %140 = vmatpush1.bf16.xpose.msra.mxu0 %v45
    %141 = vmatprep.subr.bf16.mxu0 0
    %142 = vmatpush1.bf16.xpose.msra.mxu0 %v46
    %143 = vmatprep.subr.bf16.mxu0 0
    %144 = vmatpush1.bf16.xpose.msra.mxu0 %v47
    %145 = vmatprep.subr.bf16.mxu0 0
    %146 = vmatpush1.bf16.xpose.msra.mxu0 %v48
    %147 = vmatprep.subr.bf16.mxu0 0
    %148 = vmatpush1.bf16.xpose.msra.mxu0 0
    %149 = vmatprep.subr.bf16.mxu0 0
    %150 = vmatpush1.bf16.xpose.msra.mxu0 0
    %151 = vmatprep.subr.bf16.mxu0 0
    %152 = vmatpush1.bf16.xpose.msra.mxu0 0
    %153 = vmatprep.subr.bf16.mxu0 0
    %154 = vmatpush1.bf16.xpose.msra.mxu0 0
    %155 = vmatprep.subr.bf16.mxu0 0
    %156 = vmatpush1.bf16.xpose.msra.mxu0 0
    %157 = vmatprep.subr.bf16.mxu0 0
    %158 = vmatpush1.bf16.xpose.msra.mxu0 0
    %159 = vmatprep.subr.bf16.mxu0 0
    %160 = vmatpush1.bf16.xpose.msra.mxu0 0
    %161 = vmatprep.subr.bf16.mxu0 0
    %162 = vmatpush1.bf16.xpose.msra.mxu0 0
    %163 = vmatprep.mubr.bf16.mxu0 0
    %164 = vmatmul.mubr.bf16.gmra.mrb[0].mxu0 %v89
    %v165 = vpop.f32.mrb[0].mxu0
    %v166 = vadd.f32 %v126, %v165
    %v167 = vpop.f32.mrb[0].mxu0
    %v168 = vpop.f32.mrb[0].mxu0
    %v169 = vpop.f32.mrb[0].mxu0
    %170 = vdwg.mxu0
    %171 = vmatprep.subr.bf16.mxu0 0
    %172 = vmatpush1.bf16.xpose.msra.mxu0 %v81
    %173 = vmatprep.subr.bf16.mxu0 0
    %174 = vmatpush1.bf16.xpose.msra.mxu0 %v82
    %175 = vmatprep.subr.bf16.mxu0 0
    %176 = vmatpush1.bf16.xpose.msra.mxu0 %v83
    %177 = vmatprep.subr.bf16.mxu0 0
    %178 = vmatpush1.bf16.xpose.msra.mxu0 %v84
    %179 = vmatprep.subr.bf16.mxu0 0
    %180 = vmatpush1.bf16.xpose.msra.mxu0 %v85
    %181 = vmatprep.subr.bf16.mxu0 0
    %182 = vmatpush1.bf16.xpose.msra.mxu0 %v86
    %183 = vmatprep.subr.bf16.mxu0 0
    %184 = vmatpush1.bf16.xpose.msra.mxu0 %v87
    %185 = vmatprep.subr.bf16.mxu0 0
    %186 = vmatpush1.bf16.xpose.msra.mxu0 %v88
    %187 = vmatprep.subr.bf16.mxu0 0
    %188 = vmatpush1.bf16.xpose.msra.mxu0 0
    %189 = vmatprep.subr.bf16.mxu0 0
    %190 = vmatpush1.bf16.xpose.msra.mxu0 0
    %191 = vmatprep.subr.bf16.mxu0 0
    %192 = vmatpush1.bf16.xpose.msra.mxu0 0
    %193 = vmatprep.subr.bf16.mxu0 0
    %194 = vmatpush1.bf16.xpose.msra.mxu0 0
    %195 = vmatprep.subr.bf16.mxu0 0
    %196 = vmatpush1.bf16.xpose.msra.mxu0 0
    %197 = vmatprep.subr.bf16.mxu0 0
    %198 = vmatpush1.bf16.xpose.msra.mxu0 0
    %199 = vmatprep.subr.bf16.mxu0 0
    %200 = vmatpush1.bf16.xpose.msra.mxu0 0
    %201 = vmatprep.subr.bf16.mxu0 0
    %202 = vmatpush1.bf16.xpose.msra.mxu0 0
    %203 = vmatprep.mubr.bf16.mxu0 0
    %204 = vmatmul.mubr.bf16.gmra.mrb[0].mxu0 %v89
    %v205 = vpop.f32.mrb[0].mxu0
    %v206 = vadd.f32 0.0, %v205
    %v207 = vpop.f32.mrb[0].mxu0
    %v208 = vpop.f32.mrb[0].mxu0
    %v209 = vpop.f32.mrb[0].mxu0
    %210 = vdwg.mxu0
    %v211 = vadd.f32 %v166, %v206
    %v212 = vld [vmem:[#allocation3] sm:$0xf]
    %v213 = vadd.f32 %v212, %v211
    %214 = vst [vmem:[#allocation3] sm:$0xf] %v213
    // Predicated region
    $region22: #{tpu_custom_call.1} parent=1 // pred_check
      %p215 = pneg %p20
    $region23: #{tpu_custom_call.1} parent=1 // pred_check_branch
      %217 = sbr.rel (%p215) target = $region25
    $region24: #{tpu_custom_call.1} parent=1 // pred_region
      %v218 = vld [vmem:[#allocation3] sm:$0xf]
      %s219 = sld [smem:[#allocation2]]
      %v220 = vstv %s219
      %v221 = vadd.f32 %v218, %v220
      %v222 = vxor.u32 %v221, 2147483648
      %v223 = vmul.f32 %v222, 1.442695
      %v224 = vpow.pop %v223
      %v225 = vadd.f32 %v224, 1.0
      %v226 = vrcp.pop %v225
      %v227 = vmul.f32 1.0, %v226
      %228 = vst [vmem:[#allocation3] sm:$0xf] %v227
    $region25: #{tpu_custom_call.1} parent=1 // pred_fallthru
      _
    // Predicated region
    $region26: #{tpu_custom_call.1} parent=1 // pred_check
      _
    $region27: #{tpu_custom_call.1} parent=1 // pred_check_branch
      %230 = sbr.rel (0) target = $region29
    $region28: #{tpu_custom_call.1} parent=1 // pred_region
      %s232 = ssub.s32 64, 64
      %233 = vsyncadd [#allocation4], %s232
      %s235 = sshll.u32 [#allocation3], 4
      %s236 = int_to_ptr.vmem [resolvable:$true] %s235
      %238 = dma.vmem_to_hbm [thread:$0]  %s236, 64, %s4, [#allocation4]
    $region29: #{tpu_custom_call.1} parent=1 // pred_fallthru
      _
    // Predicated region
    $region30: #{tpu_custom_call.1} parent=1 // pred_check
      _
    $region31: #{tpu_custom_call.1} parent=1 // pred_check_branch
      %240 = sbr.rel (0) target = $region33
    $region32: #{tpu_custom_call.1} parent=1 // pred_region
      %241 = dma.done [#allocation4], 64
    $region33: #{tpu_custom_call.1} parent=1 // pred_fallthru
      _
    %242 = vsyncpa [#allocation4], 1

</llo_original>
